<compile_context>
chip_gen: v5e
topology: v5e:2x2
jax: 0.10.0
libtpu: 0.0.40
codegen_flags: <defaults>
</compile_context>

<pallas_src>
import functools

import jax
import jax.numpy as jnp
from jax import lax
from jax.experimental import pallas as pl
from jax.experimental.pallas import tpu as pltpu


# ----------------------------------------------------------------------------
# small helpers
# ----------------------------------------------------------------------------
def _round_up(x: int, m: int) -> int:
    return (x + m - 1) // m * m


_SQRT_2_OVER_PI = 0.7978845608028654
_INV_SQRT2 = 0.7071067811865475


def _apply_activation(h, activation: str):
    if activation == "gelu":
        # tanh approximation: transcendental goes to the EUP slot (free
        # alongside MXU/VPU); small deviation from torch's exact erf GELU.
        return 0.5 * h * (1.0 + jnp.tanh(_SQRT_2_OVER_PI *
                                         (h + 0.044715 * h * h * h)))
    if activation == "gelu_exact":
        # Matches torch.nn.GELU() default (erf based), computed in f32.
        return 0.5 * h * (1.0 + lax.erf(h * _INV_SQRT2))
    if activation == "relu":
        return jnp.maximum(h, 0.0)
    raise ValueError(f"unsupported activation: {activation}")


def _vmem_cap_bytes() -> int:
    """Usable VMEM budget for this kernel (generation-aware, with headroom)."""
    try:
        phys = int(pltpu.get_tpu_info().vmem_capacity_bytes)
    except Exception:
        phys = 64 << 20  # conservative: assume v7x-style 64 MiB per TC
    return max(24 << 20, min(phys - (8 << 20), 112 << 20))


def _choose_tb(n_rows: int, max_tb: int) -> int:
    """Batch tile: multiple of 16, <= max_tb, avoiding mostly-padded tiles."""
    rows = _round_up(max(n_rows, 1), 16)
    max_tb = max(16, (min(max_tb, rows) // 16) * 16)
    if rows <= max_tb:
        return rows
    lo = max(16, ((max_tb // 2) // 16) * 16)
    best_t = max_tb
    best_pad = _round_up(rows, max_tb) - rows
    for cand in range(max_tb - 16, lo - 1, -16):
        pad = _round_up(rows, cand) - rows
        if pad < best_pad:
            best_t, best_pad = cand, pad
    return best_t


def _choose_tk(d_ff: int, max_tk: int) -> int:
    """d_ff reduction tile: multiple of 128, minimizing padded d_ff."""
    dff128 = _round_up(d_ff, 128)
    hi = max(128, min(_round_up(max_tk, 128), dff128))
    best_key, best_tk = None, 128
    for cand in range(hi, 127, -128):
        key = (_round_up(dff128, cand), -cand)   # least padding, then largest
        if best_key is None or key < best_key:
            best_key, best_tk = key, cand
    return best_tk


# ----------------------------------------------------------------------------
# kernels
# ----------------------------------------------------------------------------
def _ffn_resident_kernel(x_ref, w1_ref, b1_ref, w2_ref, b2_ref, o_ref,
                         *, activation: str):
    # Weights are VMEM-resident (constant index maps); grid tiles the batch.
    h = jnp.dot(x_ref[...], w1_ref[...], preferred_element_type=jnp.float32)
    h = _apply_activation(h + b1_ref[...], activation)
    acc = jnp.dot(h.astype(w2_ref.dtype), w2_ref[...],
                  preferred_element_type=jnp.float32)
    o_ref[...] = (acc + b2_ref[...]).astype(o_ref.dtype)


def _ffn_streaming_kernel(x_ref, w1_ref, b1_ref, w2_ref, b2_ref, o_ref,
                          acc_ref, *, activation: str):
    # Grid: (batch tiles, d_ff reduction tiles); f32 accumulator in VMEM.
    k = pl.program_id(1)

    @pl.when(k == 0)
    def _init():
        acc_ref[...] = jnp.zeros_like(acc_ref)

    # w1 is pre-blocked to [nk, dm_p, tk]; this tile is a contiguous DMA.
    h = jnp.dot(x_ref[...], w1_ref[0], preferred_element_type=jnp.float32)
    h = _apply_activation(h + b1_ref[...], activation)
    acc_ref[...] += jnp.dot(h.astype(w2_ref.dtype), w2_ref[...],
                            preferred_element_type=jnp.float32)

    @pl.when(k == pl.num_programs(1) - 1)
    def _finalize():
        o_ref[...] = (acc_ref[...] + b2_ref[...]).astype(o_ref.dtype)


# ----------------------------------------------------------------------------
# wrapper
# ----------------------------------------------------------------------------
def feed_forward(x, w1, b1, w2, b2, *, activation: str = "gelu",
                 tb: int | None = None, tk: int | None = None,
                 weight_resident: bool | None = None,
                 compute_dtype=jnp.bfloat16, out_dtype=None):
    """Fused MLP forward.

    x:  [..., d_model]   (leading dims flattened into the token axis)
    w1: [d_model, d_ff]  (transposed vs. torch nn.Linear.weight)
    b1: [d_ff] or None
    w2: [d_ff, d_model]
    b2: [d_model] or None
    returns: same shape as x.
    """
    *lead, d_model = x.shape
    d_ff = w1.shape[1]
    assert w1.shape == (d_model, d_ff)
    assert w2.shape == (d_ff, d_model)
    if b1 is None:
        b1 = jnp.zeros((d_ff,), jnp.float32)
    if b2 is None:
        b2 = jnp.zeros((d_model,), jnp.float32)
    assert b1.shape == (d_ff,) and b2.shape == (d_model,)
    out_dtype = out_dtype or x.dtype

    x2 = x.reshape(-1, d_model)
    B = x2.shape[0]

    cbytes = jnp.dtype(compute_dtype).itemsize
    obytes = jnp.dtype(out_dtype).itemsize
    cap = _vmem_cap_bytes()
    slack = 2 << 20

    dm_p = _round_up(d_model, 128)     # lanes (contraction + output)
    dff128 = _round_up(d_ff, 128)

    # --- weight-resident feasibility -----------------------------------------
    # Both padded bf16 weights live in VMEM for the whole call (x2: the
    # pipeline still allocates two buffers even for constant index maps).
    res_fixed = 2 * (2 * dm_p * dff128 * cbytes + dff128 * 4 + dm_p * 4) + slack
    res_per_row = (2 * dm_p * cbytes        # x tile (double-buffered)
                   + 2 * dm_p * obytes      # out tile (double-buffered)
                   + 2 * dff128 * 4         # f32 h + activation/cast temporaries
                   + dm_p * 4)              # f32 second-matmul result pre-cast
    res_max_tb = (cap - res_fixed) // res_per_row if cap > res_fixed else 0

    if weight_resident is None:
        weight_resident = res_max_tb >= min(_round_up(B, 16), 128)

    kern_act = {"activation": activation}

    if weight_resident:
        # ---- weight-resident path: weights DMA'd from HBM exactly once ------
        dff_p = dff128
        tb_eff = _choose_tb(B, min(tb or 1024, max(16, res_max_tb)))
        B_p = _round_up(B, tb_eff)

        x_p = jnp.pad(x2, ((0, B_p - B), (0, dm_p - d_model))).astype(compute_dtype)
        w1_p = jnp.pad(w1, ((0, dm_p - d_model), (0, dff_p - d_ff))).astype(compute_dtype)
        b1_p = jnp.pad(b1, (0, dff_p - d_ff)).astype(jnp.float32).reshape(1, dff_p)
        w2_p = jnp.pad(w2, ((0, dff_p - d_ff), (0, dm_p - d_model))).astype(compute_dtype)
        b2_p = jnp.pad(b2, (0, dm_p - d_model)).astype(jnp.float32).reshape(1, dm_p)

        budget = res_fixed + tb_eff * res_per_row
        vmem_limit = int(min(cap, max(32 << 20, 2 * budget + (4 << 20))))

        out_padded = pl.pallas_call(
            functools.partial(_ffn_resident_kernel, **kern_act),
            out_shape=jax.ShapeDtypeStruct((B_p, dm_p), out_dtype),
            grid=(B_p // tb_eff,),
            in_specs=[
                pl.BlockSpec((tb_eff, dm_p), lambda i: (i, 0)),   # x: batch tile
                pl.BlockSpec((dm_p, dff_p), lambda i: (0, 0)),    # w1: resident
                pl.BlockSpec((1, dff_p),    lambda i: (0, 0)),    # b1: resident
                pl.BlockSpec((dff_p, dm_p), lambda i: (0, 0)),    # w2: resident
                pl.BlockSpec((1, dm_p),     lambda i: (0, 0)),    # b2: resident
            ],
            out_specs=pl.BlockSpec((tb_eff, dm_p), lambda i: (i, 0)),
            compiler_params=pltpu.CompilerParams(
                dimension_semantics=("parallel",),
                vmem_limit_bytes=vmem_limit,
            ),
        )(x_p, w1_p, b1_p, w2_p, b2_p)
    else:
        # ---- streaming path: 2-D grid, f32 accumulator over d_ff tiles ------
        tk_eff = _choose_tk(d_ff, tk or 1024)
        dff_p = _round_up(dff128, tk_eff)
        nk = dff_p // tk_eff

        stream_fixed = (2 * dm_p * tk_eff * cbytes      # w1 tile (db)
                        + 2 * tk_eff * dm_p * cbytes    # w2 tile (db)
                        + 2 * tk_eff * 4                # b1 tile (db, f32)
                        + 2 * dm_p * 4) + slack         # b2 (db, f32)
        stream_per_row = (2 * dm_p * cbytes             # x tile (db)
                          + 2 * dm_p * obytes           # out tile (db)
                          + dm_p * 4                    # f32 accumulator scratch
                          + 2 * tk_eff * 4)             # f32 h + temporaries
        stream_max_tb = (cap - stream_fixed) // stream_per_row \
            if cap > stream_fixed else 16
        tb_eff = _choose_tb(B, min(tb or 512, max(16, stream_max_tb)))
        B_p = _round_up(B, tb_eff)

        x_p = jnp.pad(x2, ((0, B_p - B), (0, dm_p - d_model))).astype(compute_dtype)
        b1_p = jnp.pad(b1, (0, dff_p - d_ff)).astype(jnp.float32).reshape(1, dff_p)
        w2_p = jnp.pad(w2, ((0, dff_p - d_ff), (0, dm_p - d_model))).astype(compute_dtype)
        b2_p = jnp.pad(b2, (0, dm_p - d_model)).astype(jnp.float32).reshape(1, dm_p)
        # Pre-block w1 -> [nk, dm_p, tk] so each streamed tile is a contiguous
        # DMA.  (In a real model do this once at weight-prep time.)
        w1_p = jnp.pad(w1, ((0, dm_p - d_model), (0, dff_p - d_ff))).astype(compute_dtype)
        w1_blk = w1_p.reshape(dm_p, nk, tk_eff).transpose(1, 0, 2)

        budget = stream_fixed + tb_eff * stream_per_row
        vmem_limit = int(min(cap, max(32 << 20, 2 * budget + (4 << 20))))

        out_padded = pl.pallas_call(
            functools.partial(_ffn_streaming_kernel, **kern_act),
            out_shape=jax.ShapeDtypeStruct((B_p, dm_p), out_dtype),
            grid=(B_p // tb_eff, nk),
            in_specs=[
                pl.BlockSpec((tb_eff, dm_p),     lambda i, k: (i, 0)),    # x
                pl.BlockSpec((1, dm_p, tk_eff),  lambda i, k: (k, 0, 0)), # w1 tile
                pl.BlockSpec((1, tk_eff),        lambda i, k: (0, k)),    # b1 tile
                pl.BlockSpec((tk_eff, dm_p),     lambda i, k: (k, 0)),    # w2 tile
                pl.BlockSpec((1, dm_p),          lambda i, k: (0, 0)),    # b2
            ],
            out_specs=pl.BlockSpec((tb_eff, dm_p), lambda i, k: (i, 0)),
            scratch_shapes=[pltpu.VMEM((tb_eff, dm_p), jnp.float32)],
            compiler_params=pltpu.CompilerParams(
                dimension_semantics=("parallel", "arbitrary"),
                vmem_limit_bytes=vmem_limit,
            ),
        )(x_p, w1_blk, b1_p, w2_p, b2_p)

    out = out_padded[:B, :d_model]
    return out.reshape(*lead, d_model)


# ----------------------------------------------------------------------------
# pure-JAX reference (same bf16-in / f32-accumulate precision as the kernel)
# ----------------------------------------------------------------------------
def reference(x, w1, b1, w2, b2, *, activation="gelu", compute_dtype=jnp.bfloat16):
    *lead, d_model = x.shape
    x2 = x.reshape(-1, d_model).astype(compute_dtype)
    h = jnp.dot(x2, w1.astype(compute_dtype), preferred_element_type=jnp.float32)
    h = _apply_activation(h + b1.astype(jnp.float32)[None, :], activation)
    o = jnp.dot(h.astype(compute_dtype), w2.astype(compute_dtype),
                preferred_element_type=jnp.float32)
    o = o + b2.astype(jnp.float32)[None, :]
    return o.astype(x.dtype).reshape(*lead, d_model)


if __name__ == "__main__":
    # Small, deliberately non-aligned ViT-like shapes (batch, seq, d_model),
    # exercising padding and both kernel paths.
    batch, seq, d_model, d_ff = 2, 8, 96, 320

    key = jax.random.PRNGKey(0)
    kx, kw1, kb1, kw2, kb2 = jax.random.split(key, 5)

    x = jax.random.normal(kx, (batch, seq, d_model), dtype=jnp.float32)
    lim1 = 1.0 / float(d_model) ** 0.5
    lim2 = 1.0 / float(d_ff) ** 0.5
    w1 = jax.random.uniform(kw1, (d_model, d_ff), jnp.float32, -lim1, lim1)
    b1 = jax.random.uniform(kb1, (d_ff,), jnp.float32, -lim1, lim1)
    w2 = jax.random.uniform(kw2, (d_ff, d_model), jnp.float32, -lim2, lim2)
    b2 = jax.random.uniform(kb2, (d_model,), jnp.float32, -lim2, lim2)

    # 1) auto path (weight-resident), tanh-approx GELU (ViT configuration).
    out_res = jax.block_until_ready(
        feed_forward(x, w1, b1, w2, b2, activation="gelu"))
    ref_gelu = reference(x, w1, b1, w2, b2, activation="gelu")
    assert out_res.shape == x.shape
    err = float(jnp.max(jnp.abs(out_res - ref_gelu)))
    assert jnp.allclose(out_res, ref_gelu, atol=2e-2, rtol=2e-2), \
        f"resident path mismatch: {err}"

    # 2) forced streaming path (2-D grid + f32 accumulator, 3 d_ff steps).
    out_str = jax.block_until_ready(
        feed_forward(x, w1, b1, w2, b2, activation="gelu",
                     weight_resident=False, tk=128, tb=16))
    err = float(jnp.max(jnp.abs(out_str - ref_gelu)))
    assert jnp.allclose(out_str, ref_gelu, atol=2e-2, rtol=2e-2), \
        f"streaming path mismatch: {err}"

    # 3) exact-erf GELU (torch.nn.GELU default) and ReLU (class default).
    out_exact = jax.block_until_ready(
        feed_forward(x, w1, b1, w2, b2, activation="gelu_exact"))
    ref_exact = reference(x, w1, b1, w2, b2, activation="gelu_exact")
    assert jnp.allclose(out_exact, ref_exact, atol=2e-2, rtol=2e-2)

    out_relu = jax.block_until_ready(
        feed_forward(x, w1, b1, w2, b2, activation="relu"))
    ref_relu = reference(x, w1, b1, w2, b2, activation="relu")
    assert jnp.allclose(out_relu, ref_relu, atol=2e-2, rtol=2e-2)

    print("KERNEL_OK")
</pallas_src>

<mosaic_0001>
module attributes {stable_mosaic.version = 11 : i64} {
  func.func @_ffn_resident_kernel(%arg0: i32, %arg1: memref<16x128xbf16, #tpu.memory_space<vmem>>, %arg2: memref<128x384xbf16, #tpu.memory_space<vmem>>, %arg3: memref<1x384xf32, #tpu.memory_space<vmem>>, %arg4: memref<384x128xbf16, #tpu.memory_space<vmem>>, %arg5: memref<1x128xf32, #tpu.memory_space<vmem>>, %arg6: memref<16x128xf32, #tpu.memory_space<vmem>>) attributes {dimension_semantics = [#tpu.dimension_semantics<parallel>], iteration_bounds = array<i64: 1>, scalar_prefetch = 0 : i64, scratch_operands = 0 : i64, tpu.core_type = #tpu.core_type<tc>, window_params = [{transform_indices = @transform_0, window_bounds = array<i64: 16, 128>}, {pipeline_mode = #tpu.pipeline_mode<synchronous>, transform_indices = @transform_1, window_bounds = array<i64: 128, 384>}, {pipeline_mode = #tpu.pipeline_mode<synchronous>, transform_indices = @transform_2, window_bounds = array<i64: 1, 384>}, {pipeline_mode = #tpu.pipeline_mode<synchronous>, transform_indices = @transform_3, window_bounds = array<i64: 384, 128>}, {pipeline_mode = #tpu.pipeline_mode<synchronous>, transform_indices = @transform_4, window_bounds = array<i64: 1, 128>}, {transform_indices = @transform_5, window_bounds = array<i64: 16, 128>}]} {
    %c0 = arith.constant 0 : index
    %c0_0 = arith.constant 0 : index
    %0 = vector.load %arg1[%c0, %c0_0] : memref<16x128xbf16, #tpu.memory_space<vmem>>, vector<16x128xbf16>
    %c0_1 = arith.constant 0 : index
    %c0_2 = arith.constant 0 : index
    %1 = vector.load %arg2[%c0_1, %c0_2] : memref<128x384xbf16, #tpu.memory_space<vmem>>, vector<128x384xbf16>
    %cst = arith.constant dense<0.000000e+00> : vector<16x384xf32>
    %2 = tpu.matmul %0, %1, %cst {dimension_numbers = #tpu.dot_dimension_numbers<[1], [0], [0], [1], [0, 0, 1, 1], [], []>} : vector<16x128xbf16>, vector<128x384xbf16>, vector<16x384xf32> -> vector<16x384xf32>
    %c0_3 = arith.constant 0 : index
    %c0_4 = arith.constant 0 : index
    %3 = vector.load %arg3[%c0_3, %c0_4] : memref<1x384xf32, #tpu.memory_space<vmem>>, vector<1x384xf32>
    %4 = vector.broadcast %3 : vector<1x384xf32> to vector<16x384xf32>
    %5 = arith.addf %2, %4 : vector<16x384xf32>
    %cst_5 = arith.constant 5.000000e-01 : f32
    %6 = vector.broadcast %cst_5 : f32 to vector<16x384xf32>
    %7 = arith.mulf %6, %5 : vector<16x384xf32>
    %cst_6 = arith.constant 4.471500e-02 : f32
    %8 = vector.broadcast %cst_6 : f32 to vector<16x384xf32>
    %9 = arith.mulf %8, %5 : vector<16x384xf32>
    %10 = arith.mulf %9, %5 : vector<16x384xf32>
    %11 = arith.mulf %10, %5 : vector<16x384xf32>
    %12 = arith.addf %5, %11 : vector<16x384xf32>
    %cst_7 = arith.constant 0.797884583 : f32
    %13 = vector.broadcast %cst_7 : f32 to vector<16x384xf32>
    %14 = arith.mulf %13, %12 : vector<16x384xf32>
    %15 = math.tanh %14 : vector<16x384xf32>
    %cst_8 = arith.constant 1.000000e+00 : f32
    %16 = vector.broadcast %cst_8 : f32 to vector<16x384xf32>
    %17 = arith.addf %16, %15 : vector<16x384xf32>
    %18 = arith.mulf %7, %17 : vector<16x384xf32>
    %19 = arith.truncf %18 : vector<16x384xf32> to vector<16x384xbf16>
    %c0_9 = arith.constant 0 : index
    %c0_10 = arith.constant 0 : index
    %20 = vector.load %arg4[%c0_9, %c0_10] : memref<384x128xbf16, #tpu.memory_space<vmem>>, vector<384x128xbf16>
    %cst_11 = arith.constant dense<0.000000e+00> : vector<16x128xf32>
    %21 = tpu.matmul %19, %20, %cst_11 {dimension_numbers = #tpu.dot_dimension_numbers<[1], [0], [0], [1], [0, 0, 1, 1], [], []>} : vector<16x384xbf16>, vector<384x128xbf16>, vector<16x128xf32> -> vector<16x128xf32>
    %c0_12 = arith.constant 0 : index
    %c0_13 = arith.constant 0 : index
    %22 = vector.load %arg5[%c0_12, %c0_13] : memref<1x128xf32, #tpu.memory_space<vmem>>, vector<1x128xf32>
    %23 = vector.broadcast %22 : vector<1x128xf32> to vector<16x128xf32>
    %24 = arith.addf %21, %23 : vector<16x128xf32>
    %c0_14 = arith.constant 0 : index
    %c0_15 = arith.constant 0 : index
    %25 = vector.load %arg6[%c0_14, %c0_15] : memref<16x128xf32, #tpu.memory_space<vmem>>, vector<16x128xf32>
    tpu.vector_store %arg6[%c0_14, %c0_15], %24 {strides = array<i32>} : memref<16x128xf32, #tpu.memory_space<vmem>>, vector<16x128xf32>,
    return
  }
  func.func @transform_0(%arg0: i32) -> (i32, i32) {
    %c0_i32 = arith.constant 0 : i32
    %c0_i32_0 = arith.constant 0 : i32
    return %arg0, %c0_i32 : i32, i32
  }
  func.func @transform_1(%arg0: i32) -> (i32, i32) {
    %c0_i32 = arith.constant 0 : i32
    %c0_i32_0 = arith.constant 0 : i32
    %c0_i32_1 = arith.constant 0 : i32
    return %c0_i32, %c0_i32_0 : i32, i32
  }
  func.func @transform_2(%arg0: i32) -> (i32, i32) {
    %c0_i32 = arith.constant 0 : i32
    %c0_i32_0 = arith.constant 0 : i32
    %c0_i32_1 = arith.constant 0 : i32
    return %c0_i32, %c0_i32_0 : i32, i32
  }
  func.func @transform_3(%arg0: i32) -> (i32, i32) {
    %c0_i32 = arith.constant 0 : i32
    %c0_i32_0 = arith.constant 0 : i32
    %c0_i32_1 = arith.constant 0 : i32
    return %c0_i32, %c0_i32_0 : i32, i32
  }
  func.func @transform_4(%arg0: i32) -> (i32, i32) {
    %c0_i32 = arith.constant 0 : i32
    %c0_i32_0 = arith.constant 0 : i32
    %c0_i32_1 = arith.constant 0 : i32
    return %c0_i32, %c0_i32_0 : i32, i32
  }
  func.func @transform_5(%arg0: i32) -> (i32, i32) {
    %c0_i32 = arith.constant 0 : i32
    %c0_i32_0 = arith.constant 0 : i32
    return %arg0, %c0_i32 : i32, i32
  }
}

</mosaic_0001>

<llo_original>
// kernel: tpu_custom_call.1
$region0: #{tpu_custom_call.1}
  #allocation0 [shape = 'u32[]', space=smem, size = 0x4, offset = 0x4, fixed_abs, tag = 'smem constant byte address 0x4 - core index']
  #allocation1 [shape = 'u32[72,128]{1,0:T(1,128)}', space=vmem, size = 0x9000, scoped, tag = 'internal scratch']
  %s0 = inlined_call_operand.hbm [shape: bf16[16,128], index: 0, kind: input, shape index: {}]
  %s1 = inlined_call_operand.hbm [shape: bf16[128,384], index: 1, kind: input, shape index: {}]
  %s2 = inlined_call_operand.hbm [shape: f32[1,384], index: 2, kind: input, shape index: {}]
  %s3 = inlined_call_operand.hbm [shape: bf16[384,128], index: 3, kind: input, shape index: {}]
  %s4 = inlined_call_operand.vmem [shape: f32[1,128], index: 4, kind: input, shape index: {}]
  %s5 = inlined_call_operand.hbm [shape: f32[16,128], index: 5, kind: output, shape index: {}]
  %s6 = sld [smem:[#allocation0]]
  $region46: #{tpu_custom_call.1} parent=0
    _
  %s8 = ssub.s32 1, %s6
  %s9 = scalar_select 0, %s8, %s6
  $region1: #{tpu_custom_call.1} parent=0
    #allocation2 [shape = 'u8[4096]{0}', space=vmem, size = 0x1000, scoped, tag = 'input window, operand 0, single buffered']
    #allocation3 [shape = 's32[1]{0}', space=sflag, size = 0x4, scoped, tag = 'scoped memory for tpu_custom_call.1']
    #allocation4 [shape = 's32[1]{0}', space=sflag, size = 0x4, scoped, tag = 'scoped memory for tpu_custom_call.1']
    #allocation5 [shape = 'u8[98304]{0}', space=vmem, size = 0x18000, scoped, tag = 'input window, operand 1, single buffered']
    #allocation6 [shape = 's32[1]{0}', space=sflag, size = 0x4, scoped, tag = 'scoped memory for tpu_custom_call.1']
    #allocation7 [shape = 'u8[1536]{0}', space=vmem, size = 0x800, scoped, tag = 'input window, operand 2, single buffered']
    #allocation8 [shape = 'u8[98304]{0}', space=vmem, size = 0x18000, scoped, tag = 'input window, operand 3, single buffered']
    #allocation9 [shape = 's32[1]{0}', space=sflag, size = 0x4, scoped, tag = 'scoped memory for tpu_custom_call.1']
    #allocation10 [shape = 'u8[8192]{0}', space=vmem, size = 0x2000, scoped, tag = 'output window, operand 0, single buffered']
    %10 = vsyncpa [#allocation3], 0
    %11 = vsyncpa [#allocation6], 0
    %12 = vsyncpa [#allocation9], 0
    %13 = vsyncpa [#allocation4], 0
    // Predicated region
    $region2: #{tpu_custom_call.1} parent=1 // pred_check
      _
    $region3: #{tpu_custom_call.1} parent=1 // pred_check_branch
      %15 = sbr.rel (0) target = $region5
    $region4: #{tpu_custom_call.1} parent=1 // pred_region
      %17 = vsyncadd [#allocation3], 0
      %s18 = sshll.u32 %s0, 4
      %s19 = int_to_ptr.hbm [resolvable:$true] %s18
      %s20 = sshll.u32 [#allocation2], 4
      %s21 = int_to_ptr.vmem [resolvable:$true] %s20
      %26 = dma.hbm_to_vmem [thread:$0]  %s19, 128, %s21, [#allocation3], 64, 64, 4
    $region5: #{tpu_custom_call.1} parent=1 // pred_fallthru
      _
    // Predicated region
    $region6: #{tpu_custom_call.1} parent=1 // pred_check
      _
    $region7: #{tpu_custom_call.1} parent=1 // pred_check_branch
      %28 = sbr.rel (0) target = $region9
    $region8: #{tpu_custom_call.1} parent=1 // pred_region
      %30 = vsyncadd [#allocation6], 0
      %s31 = sshll.u32 %s1, 4
      %s32 = int_to_ptr.hbm [resolvable:$true] %s31
      %s33 = sshll.u32 [#allocation5], 4
      %s34 = int_to_ptr.vmem [resolvable:$true] %s33
      %39 = dma.hbm_to_vmem [thread:$0]  %s32, 3072, %s34, [#allocation6], 192, 192, 12
    $region9: #{tpu_custom_call.1} parent=1 // pred_fallthru
      _
    // Predicated region
    $region10: #{tpu_custom_call.1} parent=1 // pred_check
      _
    $region11: #{tpu_custom_call.1} parent=1 // pred_check_branch
      %41 = sbr.rel (0) target = $region13
    $region12: #{tpu_custom_call.1} parent=1 // pred_region
      %43 = vsyncadd [#allocation6], 0
      %s45 = sshll.u32 %s2, 4
      %s46 = int_to_ptr.hbm [resolvable:$true] %s45
      %s47 = sshll.u32 [#allocation7], 4
      %s48 = int_to_ptr.vmem [resolvable:$true] %s47
      %50 = dma.hbm_to_vmem [thread:$0]  %s46, 48, %s48, [#allocation6]
    $region13: #{tpu_custom_call.1} parent=1 // pred_fallthru
      _
    // Predicated region
    $region14: #{tpu_custom_call.1} parent=1 // pred_check
      _
    $region15: #{tpu_custom_call.1} parent=1 // pred_check_branch
      %52 = sbr.rel (0) target = $region17
    $region16: #{tpu_custom_call.1} parent=1 // pred_region
      %54 = vsyncadd [#allocation9], 0
      %s55 = sshll.u32 %s3, 4
      %s56 = int_to_ptr.hbm [resolvable:$true] %s55
      %s57 = sshll.u32 [#allocation8], 4
      %s58 = int_to_ptr.vmem [resolvable:$true] %s57
      %63 = dma.hbm_to_vmem [thread:$0]  %s56, 3072, %s58, [#allocation9], 64, 64, 4
    $region17: #{tpu_custom_call.1} parent=1 // pred_fallthru
      _
    // Predicated region
    $region18: #{tpu_custom_call.1} parent=1 // pred_check
      _
    $region19: #{tpu_custom_call.1} parent=1 // pred_check_branch
      %65 = sbr.rel (0) target = $region21
    $region20: #{tpu_custom_call.1} parent=1 // pred_region
      _
    $region21: #{tpu_custom_call.1} parent=1 // pred_fallthru
      _
    // Predicated region
    $region22: #{tpu_custom_call.1} parent=1 // pred_check
      _
    $region23: #{tpu_custom_call.1} parent=1 // pred_check_branch
      %67 = sbr.rel (0) target = $region25
    $region24: #{tpu_custom_call.1} parent=1 // pred_region
      %69 = dma.done [#allocation3], 128
    $region25: #{tpu_custom_call.1} parent=1 // pred_fallthru
      _
    // Predicated region
    $region26: #{tpu_custom_call.1} parent=1 // pred_check
      _
    $region27: #{tpu_custom_call.1} parent=1 // pred_check_branch
      %71 = sbr.rel (0) target = $region29
    $region28: #{tpu_custom_call.1} parent=1 // pred_region
      %73 = dma.done [#allocation6], 3072
    $region29: #{tpu_custom_call.1} parent=1 // pred_fallthru
      _
    // Predicated region
    $region30: #{tpu_custom_call.1} parent=1 // pred_check
      _
    $region31: #{tpu_custom_call.1} parent=1 // pred_check_branch
      %75 = sbr.rel (0) target = $region33
    $region32: #{tpu_custom_call.1} parent=1 // pred_region
      %77 = dma.done [#allocation6], 48
    $region33: #{tpu_custom_call.1} parent=1 // pred_fallthru
      _
    // Predicated region
    $region34: #{tpu_custom_call.1} parent=1 // pred_check
      _
    $region35: #{tpu_custom_call.1} parent=1 // pred_check_branch
      %79 = sbr.rel (0) target = $region37
    $region36: #{tpu_custom_call.1} parent=1 // pred_region
      %81 = dma.done [#allocation9], 3072
    $region37: #{tpu_custom_call.1} parent=1 // pred_fallthru
      _
    %v82 = vld [vmem:[#allocation2] sm:$0xf]
    %v83 = vld [vmem:[#allocation2 + $0x4] sm:$0xf]
    %v84 = vld [vmem:[#allocation5] sm:$0xff]
    %v85 = vld [vmem:[#allocation5 + $0x8] sm:$0xf]
    %v86 = vld [vmem:[#allocation5 + $0xc] sm:$0xff]
    %v87 = vld [vmem:[#allocation5 + $0x14] sm:$0xf]
    %v88 = vld [vmem:[#allocation5 + $0x18] sm:$0xff]
    %v89 = vld [vmem:[#allocation5 + $0x20] sm:$0xf]
    %v90 = vld [vmem:[#allocation5 + $0x24] sm:$0xff]
    %v91 = vld [vmem:[#allocation5 + $0x2c] sm:$0xf]
    %v92 = vld [vmem:[#allocation5 + $0x30] sm:$0xff]
    %v93 = vld [vmem:[#allocation5 + $0x38] sm:$0xf]
    %v94 = vld [vmem:[#allocation5 + $0x3c] sm:$0xff]
    %v95 = vld [vmem:[#allocation5 + $0x44] sm:$0xf]
    %v96 = vld [vmem:[#allocation5 + $0x48] sm:$0xff]
    %v97 = vld [vmem:[#allocation5 + $0x50] sm:$0xf]
    %v98 = vld [vmem:[#allocation5 + $0x54] sm:$0xff]
    %v99 = vld [vmem:[#allocation5 + $0x5c] sm:$0xf]
    %v100 = vld [vmem:[#allocation5 + $0x60] sm:$0xff]
    %v101 = vld [vmem:[#allocation5 + $0x68] sm:$0xf]
    %v102 = vld [vmem:[#allocation5 + $0x6c] sm:$0xff]
    %v103 = vld [vmem:[#allocation5 + $0x74] sm:$0xf]
    %v104 = vld [vmem:[#allocation5 + $0x78] sm:$0xff]
    %v105 = vld [vmem:[#allocation5 + $0x80] sm:$0xf]
    %v106 = vld [vmem:[#allocation5 + $0x84] sm:$0xff]
    %v107 = vld [vmem:[#allocation5 + $0x8c] sm:$0xf]
    %v108 = vld [vmem:[#allocation5 + $0x90] sm:$0xff]
    %v109 = vld [vmem:[#allocation5 + $0x98] sm:$0xf]
    %v110 = vld [vmem:[#allocation5 + $0x9c] sm:$0xff]
    %v111 = vld [vmem:[#allocation5 + $0xa4] sm:$0xf]
    %v112 = vld [vmem:[#allocation5 + $0xa8] sm:$0xff]
    %v113 = vld [vmem:[#allocation5 + $0xb0] sm:$0xf]
    %v114 = vld [vmem:[#allocation5 + $0xb4] sm:$0xff]
    %v115 = vld [vmem:[#allocation5 + $0xbc] sm:$0xf]
    %v116 = vld [vmem:[#allocation7] sm:$0x7]
    %v118 = vperm.slane %v116, 0
    %v119 = vperm.slane %v116, 1
    %v120 = vperm.slane %v116, 2
    %v126 = vunpack.c.l.b16 %v82
    %v127 = vunpack.c.l.b16 %v83
    %v128 = vpack.c.b16 %v127, %v126
    %v162 = vunpack.c.l.b16 %v84
    %v163 = vunpack.c.h.b16 %v84
    %v164 = vunpack.c.l.b16 %v85
    %v165 = vunpack.c.l.b16 %v86
    %v166 = vunpack.c.h.b16 %v86
    %v167 = vunpack.c.l.b16 %v87
    %v168 = vunpack.c.l.b16 %v88
    %v169 = vunpack.c.h.b16 %v88
    %v170 = vunpack.c.l.b16 %v89
    %v171 = vunpack.c.l.b16 %v90
    %v172 = vunpack.c.h.b16 %v90
    %v173 = vunpack.c.l.b16 %v91
    %v174 = vunpack.c.l.b16 %v92
    %v175 = vunpack.c.h.b16 %v92
    %v176 = vunpack.c.l.b16 %v93
    %v177 = vunpack.c.l.b16 %v94
    %v178 = vunpack.c.h.b16 %v94
    %v179 = vunpack.c.l.b16 %v95
    %v180 = vunpack.c.l.b16 %v96
    %v181 = vunpack.c.h.b16 %v96
    %v182 = vunpack.c.l.b16 %v97
    %v183 = vunpack.c.l.b16 %v98
    %v184 = vunpack.c.h.b16 %v98
    %v185 = vunpack.c.l.b16 %v99
    %v186 = vunpack.c.l.b16 %v100
    %v187 = vunpack.c.h.b16 %v100
    %v188 = vunpack.c.l.b16 %v101
    %v189 = vunpack.c.l.b16 %v102
    %v190 = vunpack.c.h.b16 %v102
    %v191 = vunpack.c.l.b16 %v103
    %v192 = vunpack.c.l.b16 %v104
    %v193 = vunpack.c.h.b16 %v104
    %v194 = vunpack.c.l.b16 %v105
    %v195 = vunpack.c.l.b16 %v106
    %v196 = vunpack.c.h.b16 %v106
    %v197 = vunpack.c.l.b16 %v107
    %v198 = vunpack.c.l.b16 %v108
    %v199 = vunpack.c.h.b16 %v108
    %v200 = vunpack.c.l.b16 %v109
    %v201 = vunpack.c.l.b16 %v110
    %v202 = vunpack.c.h.b16 %v110
    %v203 = vunpack.c.l.b16 %v111
    %v204 = vunpack.c.l.b16 %v112
    %v205 = vunpack.c.h.b16 %v112
    %v206 = vunpack.c.l.b16 %v113
    %v207 = vunpack.c.l.b16 %v114
    %v208 = vunpack.c.h.b16 %v114
    %v209 = vunpack.c.l.b16 %v115
    %v210 = vpack.c.b16 %v165, %v162
    %v211 = vpack.c.b16 %v166, %v163
    %v212 = vpack.c.b16 %v167, %v164
    %v213 = vpack.c.b16 %v171, %v168
    %v214 = vpack.c.b16 %v172, %v169
    %v215 = vpack.c.b16 %v173, %v170
    %v216 = vpack.c.b16 %v177, %v174
    %v217 = vpack.c.b16 %v178, %v175
    %v218 = vpack.c.b16 %v179, %v176
    %v219 = vpack.c.b16 %v183, %v180
    %v220 = vpack.c.b16 %v184, %v181
    %v221 = vpack.c.b16 %v185, %v182
    %v222 = vpack.c.b16 %v189, %v186
    %v223 = vpack.c.b16 %v190, %v187
    %v224 = vpack.c.b16 %v191, %v188
    %v225 = vpack.c.b16 %v195, %v192
    %v226 = vpack.c.b16 %v196, %v193
    %v227 = vpack.c.b16 %v197, %v194
    %v228 = vpack.c.b16 %v201, %v198
    %v229 = vpack.c.b16 %v202, %v199
    %v230 = vpack.c.b16 %v203, %v200
    %v231 = vpack.c.b16 %v207, %v204
    %v232 = vpack.c.b16 %v208, %v205
    %v233 = vpack.c.b16 %v209, %v206
    %258 = vmatpush.bf16.msra.mxu0 %v231
    %259 = vmatpush.bf16.msra.mxu0 %v228
    %260 = vmatpush.bf16.msra.mxu0 %v225
    %261 = vmatpush.bf16.msra.mxu0 %v222
    %262 = vmatpush.bf16.msra.mxu0 %v219
    %263 = vmatpush.bf16.msra.mxu0 %v216
    %264 = vmatpush.bf16.msra.mxu0 %v213
    %265 = vmatpush.bf16.msra.mxu0 %v210
    %266 = vmatmul.bf16.gmra.mxu0 %v128
    %v267 = vpop.f32.mrf.mxu0
    %v268 = vadd.f32 %v118, %v267
    %v269 = vpop.f32.mrf.mxu0
    %v270 = vadd.f32 %v118, %v269
    %271 = vdwg.mxu0
    %272 = vmatpush.bf16.msra.mxu0 %v232
    %273 = vmatpush.bf16.msra.mxu0 %v229
    %274 = vmatpush.bf16.msra.mxu0 %v226
    %275 = vmatpush.bf16.msra.mxu0 %v223
    %276 = vmatpush.bf16.msra.mxu0 %v220
    %277 = vmatpush.bf16.msra.mxu0 %v217
    %278 = vmatpush.bf16.msra.mxu0 %v214
    %279 = vmatpush.bf16.msra.mxu0 %v211
    %280 = vmatmul.bf16.gmra.mxu0 %v128
    %v281 = vpop.f32.mrf.mxu0
    %v282 = vadd.f32 %v119, %v281
    %v283 = vpop.f32.mrf.mxu0
    %v284 = vadd.f32 %v119, %v283
    %285 = vdwg.mxu0
    %286 = vmatpush.bf16.msra.mxu0 %v233
    %287 = vmatpush.bf16.msra.mxu0 %v230
    %288 = vmatpush.bf16.msra.mxu0 %v227
    %289 = vmatpush.bf16.msra.mxu0 %v224
    %290 = vmatpush.bf16.msra.mxu0 %v221
    %291 = vmatpush.bf16.msra.mxu0 %v218
    %292 = vmatpush.bf16.msra.mxu0 %v215
    %293 = vmatpush.bf16.msra.mxu0 %v212
    %294 = vmatmul.bf16.gmra.mxu0 %v128
    %v295 = vpop.f32.mrf.mxu0
    %v296 = vadd.f32 %v120, %v295
    %v297 = vpop.f32.mrf.mxu0
    %v298 = vadd.f32 %v120, %v297
    %299 = vdwg.mxu0
    %v300 = vmul.f32 %v268, 0.5
    %v301 = vmul.f32 %v282, 0.5
    %v302 = vmul.f32 %v296, 0.5
    %v303 = vmul.f32 %v270, 0.5
    %v304 = vmul.f32 %v284, 0.5
    %v305 = vmul.f32 %v298, 0.5
    %v306 = vmul.f32 %v268, 0.044715
    %v307 = vmul.f32 %v282, 0.044715
    %v308 = vmul.f32 %v296, 0.044715
    %v309 = vmul.f32 %v270, 0.044715
    %v310 = vmul.f32 %v284, 0.044715
    %v311 = vmul.f32 %v298, 0.044715
    %v312 = vmul.f32 %v306, %v268
    %v313 = vmul.f32 %v307, %v282
    %v314 = vmul.f32 %v308, %v296
    %v315 = vmul.f32 %v309, %v270
    %v316 = vmul.f32 %v310, %v284
    %v317 = vmul.f32 %v311, %v298
    %v318 = vmul.f32 %v312, %v268
    %v319 = vmul.f32 %v313, %v282
    %v320 = vmul.f32 %v314, %v296
    %v321 = vmul.f32 %v315, %v270
    %v322 = vmul.f32 %v316, %v284
    %v323 = vmul.f32 %v317, %v298
    %v324 = vadd.f32 %v268, %v318
    %v325 = vadd.f32 %v282, %v319
    %v326 = vadd.f32 %v296, %v320
    %v327 = vadd.f32 %v270, %v321
    %v328 = vadd.f32 %v284, %v322
    %v329 = vadd.f32 %v298, %v323
    %v330 = vmul.f32 %v324, 0.7978846
    %v331 = vmul.f32 %v325, 0.7978846
    %v332 = vmul.f32 %v326, 0.7978846
    %v333 = vmul.f32 %v327, 0.7978846
    %v334 = vmul.f32 %v328, 0.7978846
    %v335 = vmul.f32 %v329, 0.7978846
    %v336 = vtanh.pop %v330
    %v337 = vtanh.pop %v331
    %v338 = vtanh.pop %v332
    %v339 = vtanh.pop %v333
    %v340 = vtanh.pop %v334
    %v341 = vtanh.pop %v335
    %v342 = vadd.f32 %v336, 1.0
    %v343 = vadd.f32 %v337, 1.0
    %v344 = vadd.f32 %v338, 1.0
    %v345 = vadd.f32 %v339, 1.0
    %v346 = vadd.f32 %v340, 1.0
    %v347 = vadd.f32 %v341, 1.0
    %v348 = vmul.f32 %v300, %v342
    %v349 = vmul.f32 %v301, %v343
    %v350 = vmul.f32 %v302, %v344
    %v351 = vmul.f32 %v303, %v345
    %v352 = vmul.f32 %v304, %v346
    %v353 = vmul.f32 %v305, %v347
    %v354 = vpack.c.bf16 %v351, %v348
    %v355 = vpack.c.bf16 %v352, %v349
    %v356 = vpack.c.bf16 %v353, %v350
    %v357 = vld [vmem:[#allocation8] sm:$0xf]
    %v358 = vld [vmem:[#allocation8 + $0x4] sm:$0xf]
    %v359 = vld [vmem:[#allocation8 + $0x8] sm:$0xf]
    %v360 = vld [vmem:[#allocation8 + $0xc] sm:$0xf]
    %v361 = vld [vmem:[#allocation8 + $0x10] sm:$0xf]
    %v362 = vld [vmem:[#allocation8 + $0x14] sm:$0xf]
    %v363 = vld [vmem:[#allocation8 + $0x18] sm:$0xf]
    %v364 = vld [vmem:[#allocation8 + $0x1c] sm:$0xf]
    %v365 = vld [vmem:[#allocation8 + $0x20] sm:$0xf]
    %v366 = vld [vmem:[#allocation8 + $0x24] sm:$0xf]
    %v367 = vld [vmem:[#allocation8 + $0x28] sm:$0xf]
    %v368 = vld [vmem:[#allocation8 + $0x2c] sm:$0xf]
    %v369 = vld [vmem:[#allocation8 + $0x30] sm:$0xf]
    %v370 = vld [vmem:[#allocation8 + $0x34] sm:$0xf]
    %v371 = vld [vmem:[#allocation8 + $0x38] sm:$0xf]
    %v372 = vld [vmem:[#allocation8 + $0x3c] sm:$0xf]
    %v373 = vld [vmem:[#allocation8 + $0x40] sm:$0xf]
    %v374 = vld [vmem:[#allocation8 + $0x44] sm:$0xf]
    %v375 = vld [vmem:[#allocation8 + $0x48] sm:$0xf]
    %v376 = vld [vmem:[#allocation8 + $0x4c] sm:$0xf]
    %v377 = vld [vmem:[#allocation8 + $0x50] sm:$0xf]
    %v378 = vld [vmem:[#allocation8 + $0x54] sm:$0xf]
    %v379 = vld [vmem:[#allocation8 + $0x58] sm:$0xf]
    %v380 = vld [vmem:[#allocation8 + $0x5c] sm:$0xf]
    %v381 = vld [vmem:[#allocation8 + $0x60] sm:$0xf]
    %v382 = vld [vmem:[#allocation8 + $0x64] sm:$0xf]
    %v383 = vld [vmem:[#allocation8 + $0x68] sm:$0xf]
    %v384 = vld [vmem:[#allocation8 + $0x6c] sm:$0xf]
    %v385 = vld [vmem:[#allocation8 + $0x70] sm:$0xf]
    %v386 = vld [vmem:[#allocation8 + $0x74] sm:$0xf]
    %v387 = vld [vmem:[#allocation8 + $0x78] sm:$0xf]
    %v388 = vld [vmem:[#allocation8 + $0x7c] sm:$0xf]
    %v389 = vld [vmem:[#allocation8 + $0x80] sm:$0xf]
    %v390 = vld [vmem:[#allocation8 + $0x84] sm:$0xf]
    %v391 = vld [vmem:[#allocation8 + $0x88] sm:$0xf]
    %v392 = vld [vmem:[#allocation8 + $0x8c] sm:$0xf]
    %v393 = vld [vmem:[#allocation8 + $0x90] sm:$0xf]
    %v394 = vld [vmem:[#allocation8 + $0x94] sm:$0xf]
    %v395 = vld [vmem:[#allocation8 + $0x98] sm:$0xf]
    %v396 = vld [vmem:[#allocation8 + $0x9c] sm:$0xf]
    %v397 = vld [vmem:[#allocation8 + $0xa0] sm:$0xf]
    %v398 = vld [vmem:[#allocation8 + $0xa4] sm:$0xf]
    %v399 = vld [vmem:[#allocation8 + $0xa8] sm:$0xf]
    %v400 = vld [vmem:[#allocation8 + $0xac] sm:$0xf]
    %v401 = vld [vmem:[#allocation8 + $0xb0] sm:$0xf]
    %v402 = vld [vmem:[#allocation8 + $0xb4] sm:$0xf]
    %v403 = vld [vmem:[#allocation8 + $0xb8] sm:$0xf]
    %v404 = vld [vmem:[#allocation8 + $0xbc] sm:$0xf]
    %v405 = vld [vmem:[%s4] sm:$0x1]
    %v407 = vperm.slane %v405, 0
    %v457 = vunpack.c.l.b16 %v357
    %v458 = vunpack.c.l.b16 %v358
    %v459 = vunpack.c.l.b16 %v359
    %v460 = vunpack.c.l.b16 %v360
    %v461 = vunpack.c.l.b16 %v361
    %v462 = vunpack.c.l.b16 %v362
    %v463 = vunpack.c.l.b16 %v363
    %v464 = vunpack.c.l.b16 %v364
    %v465 = vunpack.c.l.b16 %v365
    %v466 = vunpack.c.l.b16 %v366
    %v467 = vunpack.c.l.b16 %v367
    %v468 = vunpack.c.l.b16 %v368
    %v469 = vunpack.c.l.b16 %v369
    %v470 = vunpack.c.l.b16 %v370
    %v471 = vunpack.c.l.b16 %v371
    %v472 = vunpack.c.l.b16 %v372
    %v473 = vunpack.c.l.b16 %v373
    %v474 = vunpack.c.l.b16 %v374
    %v475 = vunpack.c.l.b16 %v375
    %v476 = vunpack.c.l.b16 %v376
    %v477 = vunpack.c.l.b16 %v377
    %v478 = vunpack.c.l.b16 %v378
    %v479 = vunpack.c.l.b16 %v379
    %v480 = vunpack.c.l.b16 %v380
    %v481 = vunpack.c.l.b16 %v381
    %v482 = vunpack.c.l.b16 %v382
    %v483 = vunpack.c.l.b16 %v383
    %v484 = vunpack.c.l.b16 %v384
    %v485 = vunpack.c.l.b16 %v385
    %v486 = vunpack.c.l.b16 %v386
    %v487 = vunpack.c.l.b16 %v387
    %v488 = vunpack.c.l.b16 %v388
    %v489 = vunpack.c.l.b16 %v389
    %v490 = vunpack.c.l.b16 %v390
    %v491 = vunpack.c.l.b16 %v391
    %v492 = vunpack.c.l.b16 %v392
    %v493 = vunpack.c.l.b16 %v393
    %v494 = vunpack.c.l.b16 %v394
    %v495 = vunpack.c.l.b16 %v395
    %v496 = vunpack.c.l.b16 %v396
    %v497 = vunpack.c.l.b16 %v397
    %v498 = vunpack.c.l.b16 %v398
    %v499 = vunpack.c.l.b16 %v399
    %v500 = vunpack.c.l.b16 %v400
    %v501 = vunpack.c.l.b16 %v401
    %v502 = vunpack.c.l.b16 %v402
    %v503 = vunpack.c.l.b16 %v403
    %v504 = vunpack.c.l.b16 %v404
    %v505 = vpack.c.b16 %v458, %v457
    %v506 = vpack.c.b16 %v460, %v459
    %v507 = vpack.c.b16 %v462, %v461
    %v508 = vpack.c.b16 %v464, %v463
    %v509 = vpack.c.b16 %v466, %v465
    %v510 = vpack.c.b16 %v468, %v467
    %v511 = vpack.c.b16 %v470, %v469
    %v512 = vpack.c.b16 %v472, %v471
    %v513 = vpack.c.b16 %v474, %v473
    %v514 = vpack.c.b16 %v476, %v475
    %v515 = vpack.c.b16 %v478, %v477
    %v516 = vpack.c.b16 %v480, %v479
    %v517 = vpack.c.b16 %v482, %v481
    %v518 = vpack.c.b16 %v484, %v483
    %v519 = vpack.c.b16 %v486, %v485
    %v520 = vpack.c.b16 %v488, %v487
    %v521 = vpack.c.b16 %v490, %v489
    %v522 = vpack.c.b16 %v492, %v491
    %v523 = vpack.c.b16 %v494, %v493
    %v524 = vpack.c.b16 %v496, %v495
    %v525 = vpack.c.b16 %v498, %v497
    %v526 = vpack.c.b16 %v500, %v499
    %v527 = vpack.c.b16 %v502, %v501
    %v528 = vpack.c.b16 %v504, %v503
    %553 = vmatpush.bf16.msra.mxu0 %v512
    %554 = vmatpush.bf16.msra.mxu0 %v511
    %555 = vmatpush.bf16.msra.mxu0 %v510
    %556 = vmatpush.bf16.msra.mxu0 %v509
    %557 = vmatpush.bf16.msra.mxu0 %v508
    %558 = vmatpush.bf16.msra.mxu0 %v507
    %559 = vmatpush.bf16.msra.mxu0 %v506
    %560 = vmatpush.bf16.msra.mxu0 %v505
    %561 = vmatmul.bf16.gmra.mxu0 %v354
    %v562 = vpop.f32.mrf.mxu0
    %v563 = vadd.f32 %v407, %v562
    %v564 = vpop.f32.mrf.mxu0
    %v565 = vadd.f32 %v407, %v564
    %566 = vdwg.mxu0
    %567 = vmatpush.bf16.msra.mxu0 %v520
    %568 = vmatpush.bf16.msra.mxu0 %v519
    %569 = vmatpush.bf16.msra.mxu0 %v518
    %570 = vmatpush.bf16.msra.mxu0 %v517
    %571 = vmatpush.bf16.msra.mxu0 %v516
    %572 = vmatpush.bf16.msra.mxu0 %v515
    %573 = vmatpush.bf16.msra.mxu0 %v514
    %574 = vmatpush.bf16.msra.mxu0 %v513
    %575 = vmatmul.bf16.gmra.mxu0 %v355
    %v576 = vpop.f32.mrf.mxu0
    %v577 = vadd.f32 %v563, %v576
    %v578 = vpop.f32.mrf.mxu0
    %v579 = vadd.f32 %v565, %v578
    %580 = vdwg.mxu0
    %581 = vmatpush.bf16.msra.mxu0 %v528
    %582 = vmatpush.bf16.msra.mxu0 %v527
    %583 = vmatpush.bf16.msra.mxu0 %v526
    %584 = vmatpush.bf16.msra.mxu0 %v525
    %585 = vmatpush.bf16.msra.mxu0 %v524
    %586 = vmatpush.bf16.msra.mxu0 %v523
    %587 = vmatpush.bf16.msra.mxu0 %v522
    %588 = vmatpush.bf16.msra.mxu0 %v521
    %589 = vmatmul.bf16.gmra.mxu0 %v356
    %v590 = vpop.f32.mrf.mxu0
    %v591 = vadd.f32 %v577, %v590
    %v592 = vpop.f32.mrf.mxu0
    %v593 = vadd.f32 %v579, %v592
    %594 = vdwg.mxu0
    %595 = vst [vmem:[#allocation10] sm:$0xff] %v591
    %596 = vst [vmem:[#allocation10 + $0x8] sm:$0xff] %v593
    // Predicated region
    $region38: #{tpu_custom_call.1} parent=1 // pred_check
      _
    $region39: #{tpu_custom_call.1} parent=1 // pred_check_branch
      %598 = sbr.rel (0) target = $region41
    $region40: #{tpu_custom_call.1} parent=1 // pred_region
      %600 = vsyncadd [#allocation4], 0
      %s601 = sshll.u32 [#allocation10], 4
      %s602 = int_to_ptr.vmem [resolvable:$true] %s601
      %s603 = sshll.u32 %s5, 4
      %s604 = int_to_ptr.hbm [resolvable:$true] %s603
      %609 = dma.vmem_to_hbm [thread:$0]  %s602, 256, %s604, [#allocation4], 128, 128, 8
    $region41: #{tpu_custom_call.1} parent=1 // pred_fallthru
      _
    // Predicated region
    $region42: #{tpu_custom_call.1} parent=1 // pred_check
      _
    $region43: #{tpu_custom_call.1} parent=1 // pred_check_branch
      %611 = sbr.rel (0) target = $region45
    $region44: #{tpu_custom_call.1} parent=1 // pred_region
      %613 = dma.done [#allocation4], 256
    $region45: #{tpu_custom_call.1} parent=1 // pred_fallthru
      _
    %614 = vsyncpa [#allocation3], 1
    %615 = vsyncpa [#allocation6], 1
    %616 = vsyncpa [#allocation9], 1
    %617 = vsyncpa [#allocation4], 1

</llo_original>
